<compile_context>
chip_gen: v6e
topology: v6e:2x2x1
jax: 0.10.0
libtpu: 0.0.40
codegen_flags: <defaults>
</compile_context>

<pallas_src>
import functools

import jax
import jax.numpy as jnp
from jax.experimental import pallas as pl
from jax.experimental.pallas import tpu as pltpu


def _mixprop_kernel(a_t_ref, w_ref, b_ref, x_ref, o_ref, *, gdep, alpha):
    # a_t_ref: (V, V)                     pre-normalized, transposed adjacency
    # w_ref  : (gdep+1, Lt*C, Lt*c_out)   per-hop kron(I_Lt, W_k.T) conv weights
    # b_ref  : (1, Lt*c_out)              bias tiled over the L_tile positions
    # x_ref  : (V, Lt*C)                  node-major slab, columns ordered (l, c)
    # o_ref  : (V, Lt*c_out)              columns ordered (l, o)
    a_t = a_t_ref[...]
    x = x_ref[...].astype(jnp.float32)

    # hop 0 contribution of the 1x1 conv (lane-dense matmul, MXU)
    acc = jnp.dot(x, w_ref[0], preferred_element_type=jnp.float32)

    # mix-hop propagation fused with per-hop conv contribution.
    # gdep is small (2-3); static unroll is fine.
    h = x
    for k in range(1, gdep + 1):
        prop = jnp.dot(a_t, h, preferred_element_type=jnp.float32)   # (V, Lt*C)
        h = alpha * x + (1.0 - alpha) * prop                          # f32 VPU blend
        acc = acc + jnp.dot(h, w_ref[k], preferred_element_type=jnp.float32)

    o_ref[...] = (acc + b_ref[...]).astype(o_ref.dtype)


def _pick_l_tile(L, cap=16):
    """Largest divisor of L that is <= cap (bounds VMEM for the kron weights)."""
    if L <= cap:
        return L
    for t in range(cap, 0, -1):
        if L % t == 0:
            return t
    return L


def mixprop_forward(x_nchw, adj, W, b, *, gdep, alpha, l_tile=None):
    """x_nchw: (N, C, V, L); adj: (V, V); W: (c_out, (gdep+1)*C); b: (c_out,)."""
    N, C, V, L = x_nchw.shape
    c_out = W.shape[0]
    assert W.shape[1] == (gdep + 1) * C

    Lt = _pick_l_tile(L) if l_tile is None else l_tile
    assert L % Lt == 0
    n_lb = L // Lt
    LC = Lt * C
    LO = Lt * c_out
    f32 = jnp.float32

    # ---- hoisted adjacency normalization:  a_t = ((adj + I) / rowsum).T ----
    a = adj.astype(f32) + jnp.eye(V, dtype=f32)
    a_t = (a / jnp.sum(a, axis=1, keepdims=True)).T                     # (V, V)

    # ---- conv weight prep: transpose + kron(I_Lt, W_k.T) expansion ----
    # Wk[k, l*C + c, m*c_out + o] = W[o, k*C + c] * delta(l, m)
    Wt = W.astype(f32).T.reshape(gdep + 1, C, c_out)                    # (K+1, C, c_out)
    eyeL = jnp.eye(Lt, dtype=f32)
    Wk = (Wt[:, None, :, None, :] * eyeL[None, :, None, :, None]).reshape(
        gdep + 1, LC, LO)                                               # (K+1, Lt*C, Lt*c_out)
    b_t = jnp.tile(b.astype(f32), Lt).reshape(1, LO)                    # (1, Lt*c_out)

    # ---- x relayout: NCHW -> (N, V, L*C), columns ordered (l, c) ----
    x_k = jnp.transpose(x_nchw, (0, 2, 3, 1)).reshape(N, V, L * C)

    out = pl.pallas_call(
        functools.partial(_mixprop_kernel, gdep=gdep, alpha=alpha),
        out_shape=jax.ShapeDtypeStruct((N, V, L * c_out), x_nchw.dtype),
        grid_spec=pltpu.PrefetchScalarGridSpec(
            num_scalar_prefetch=0,
            grid=(N, n_lb),
            in_specs=[
                pl.BlockSpec((V, V), lambda n, lb: (0, 0)),
                pl.BlockSpec((gdep + 1, LC, LO), lambda n, lb: (0, 0, 0)),
                pl.BlockSpec((1, LO), lambda n, lb: (0, 0)),
                pl.BlockSpec((pl.Squeezed(), V, LC), lambda n, lb: (n, 0, lb)),
            ],
            out_specs=pl.BlockSpec((pl.Squeezed(), V, LO),
                                   lambda n, lb: (n, 0, lb)),
        ),
        compiler_params=pltpu.CompilerParams(
            dimension_semantics=("parallel", "parallel"),
            vmem_limit_bytes=32 * 1024 * 1024),
    )(a_t, Wk, b_t, x_k)

    # (N, V, L*c_out) -> (N, V, L, c_out) -> NCHW (N, c_out, V, L)
    return jnp.transpose(out.reshape(N, V, L, c_out), (0, 3, 1, 2))


def mixprop_ref(x, adj, W, b, gdep, alpha):
    """Pure-JAX reference matching the PyTorch forward."""
    V = adj.shape[0]
    a = adj + jnp.eye(V, dtype=x.dtype)
    d = a.sum(axis=1)
    a_n = a / d[:, None]
    h = x
    out = [h]
    for _ in range(gdep):
        h = alpha * x + (1.0 - alpha) * jnp.einsum('ncvl,vw->ncwl', h, a_n)
        out.append(h)
    ho = jnp.concatenate(out, axis=1)
    y = jnp.einsum('nivl,oi->novl', ho, W) + b[None, :, None, None]
    return y


if __name__ == "__main__":
    key = jax.random.PRNGKey(0)
    N, c_in, V, L = 2, 4, 16, 8
    gdep, alpha, dropout = 2, 0.05, 0.3   # dropout is stored but unused in forward
    c_out = 8

    k1, k2, k3, k4 = jax.random.split(key, 4)
    x = jax.random.normal(k1, (N, c_in, V, L), dtype=jnp.float32)
    adj = jax.random.uniform(k2, (V, V), dtype=jnp.float32)

    # Conv2d((gdep+1)*c_in -> c_out, kernel 1x1) default-style init, deterministic.
    fan_in = (gdep + 1) * c_in
    bound = 1.0 / (fan_in ** 0.5)
    W = jax.random.uniform(k3, (c_out, fan_in), minval=-bound, maxval=bound,
                           dtype=jnp.float32)
    b = jax.random.uniform(k4, (c_out,), minval=-bound, maxval=bound,
                           dtype=jnp.float32)

    y = mixprop_forward(x, adj, W, b, gdep=gdep, alpha=alpha)
    y = jax.block_until_ready(y)

    y_ref = mixprop_ref(x, adj, W, b, gdep, alpha)
    assert y.shape == (N, c_out, V, L), y.shape
    max_err = float(jnp.max(jnp.abs(y - y_ref)))
    assert jnp.allclose(y, y_ref, rtol=2e-3, atol=2e-3), f"max_err={max_err}"

    print("KERNEL_OK")
</pallas_src>

<mosaic_0001>
module attributes {stable_mosaic.version = 11 : i64} {
  func.func @_mixprop_kernel(%arg0: i32, %arg1: i32, %arg2: memref<16x16xf32, #tpu.memory_space<vmem>>, %arg3: memref<3x32x64xf32, #tpu.memory_space<vmem>>, %arg4: memref<1x64xf32, #tpu.memory_space<vmem>>, %arg5: memref<1x16x32xf32, #tpu.memory_space<vmem>>, %arg6: memref<1x16x64xf32, #tpu.memory_space<vmem>>) attributes {dimension_semantics = [#tpu.dimension_semantics<parallel>, #tpu.dimension_semantics<parallel>], iteration_bounds = array<i64: 2, 1>, scalar_prefetch = 0 : i64, scratch_operands = 0 : i64, tpu.core_type = #tpu.core_type<tc>, window_params = [{pipeline_mode = #tpu.pipeline_mode<synchronous>, transform_indices = @transform_0, window_bounds = array<i64: 16, 16>}, {pipeline_mode = #tpu.pipeline_mode<synchronous>, transform_indices = @transform_1, window_bounds = array<i64: 3, 32, 64>}, {pipeline_mode = #tpu.pipeline_mode<synchronous>, transform_indices = @transform_2, window_bounds = array<i64: 1, 64>}, {transform_indices = @transform_3, window_bounds = array<i64: 1, 16, 32>}, {transform_indices = @transform_4, window_bounds = array<i64: 1, 16, 64>}]} {
    %c0 = arith.constant 0 : index
    %c0_0 = arith.constant 0 : index
    %0 = vector.load %arg2[%c0, %c0_0] : memref<16x16xf32, #tpu.memory_space<vmem>>, vector<16x16xf32>
    %c0_1 = arith.constant 0 : index
    %c0_2 = arith.constant 0 : index
    %c0_3 = arith.constant 0 : index
    %1 = vector.load %arg5[%c0_1, %c0_2, %c0_3] : memref<1x16x32xf32, #tpu.memory_space<vmem>>, vector<1x16x32xf32>
    %2 = vector.shape_cast %1 : vector<1x16x32xf32> to vector<16x32xf32>
    %c0_4 = arith.constant 0 : index
    %c0_5 = arith.constant 0 : index
    %c0_6 = arith.constant 0 : index
    %3 = vector.load %arg3[%c0_4, %c0_5, %c0_6] : memref<3x32x64xf32, #tpu.memory_space<vmem>>, vector<1x32x64xf32>
    %4 = vector.shape_cast %3 : vector<1x32x64xf32> to vector<32x64xf32>
    %cst = arith.constant dense<0.000000e+00> : vector<16x64xf32>
    %5 = tpu.matmul %2, %4, %cst {dimension_numbers = #tpu.dot_dimension_numbers<[1], [0], [0], [1], [0, 0, 1, 1], [], []>} : vector<16x32xf32>, vector<32x64xf32>, vector<16x64xf32> -> vector<16x64xf32>
    %cst_7 = arith.constant dense<0.000000e+00> : vector<16x32xf32>
    %6 = tpu.matmul %0, %2, %cst_7 {dimension_numbers = #tpu.dot_dimension_numbers<[1], [0], [0], [1], [0, 0, 1, 1], [], []>} : vector<16x16xf32>, vector<16x32xf32>, vector<16x32xf32> -> vector<16x32xf32>
    %cst_8 = arith.constant 5.000000e-02 : f32
    %7 = vector.broadcast %cst_8 : f32 to vector<16x32xf32>
    %8 = arith.mulf %7, %2 : vector<16x32xf32>
    %cst_9 = arith.constant 0.949999988 : f32
    %9 = vector.broadcast %cst_9 : f32 to vector<16x32xf32>
    %10 = arith.mulf %9, %6 : vector<16x32xf32>
    %11 = arith.addf %8, %10 : vector<16x32xf32>
    %c1 = arith.constant 1 : index
    %c0_10 = arith.constant 0 : index
    %c0_11 = arith.constant 0 : index
    %12 = vector.load %arg3[%c1, %c0_10, %c0_11] : memref<3x32x64xf32, #tpu.memory_space<vmem>>, vector<1x32x64xf32>
    %13 = vector.shape_cast %12 : vector<1x32x64xf32> to vector<32x64xf32>
    %cst_12 = arith.constant dense<0.000000e+00> : vector<16x64xf32>
    %14 = tpu.matmul %11, %13, %cst_12 {dimension_numbers = #tpu.dot_dimension_numbers<[1], [0], [0], [1], [0, 0, 1, 1], [], []>} : vector<16x32xf32>, vector<32x64xf32>, vector<16x64xf32> -> vector<16x64xf32>
    %15 = arith.addf %5, %14 : vector<16x64xf32>
    %cst_13 = arith.constant dense<0.000000e+00> : vector<16x32xf32>
    %16 = tpu.matmul %0, %11, %cst_13 {dimension_numbers = #tpu.dot_dimension_numbers<[1], [0], [0], [1], [0, 0, 1, 1], [], []>} : vector<16x16xf32>, vector<16x32xf32>, vector<16x32xf32> -> vector<16x32xf32>
    %cst_14 = arith.constant 5.000000e-02 : f32
    %17 = vector.broadcast %cst_14 : f32 to vector<16x32xf32>
    %18 = arith.mulf %17, %2 : vector<16x32xf32>
    %cst_15 = arith.constant 0.949999988 : f32
    %19 = vector.broadcast %cst_15 : f32 to vector<16x32xf32>
    %20 = arith.mulf %19, %16 : vector<16x32xf32>
    %21 = arith.addf %18, %20 : vector<16x32xf32>
    %c2 = arith.constant 2 : index
    %c0_16 = arith.constant 0 : index
    %c0_17 = arith.constant 0 : index
    %22 = vector.load %arg3[%c2, %c0_16, %c0_17] : memref<3x32x64xf32, #tpu.memory_space<vmem>>, vector<1x32x64xf32>
    %23 = vector.shape_cast %22 : vector<1x32x64xf32> to vector<32x64xf32>
    %cst_18 = arith.constant dense<0.000000e+00> : vector<16x64xf32>
    %24 = tpu.matmul %21, %23, %cst_18 {dimension_numbers = #tpu.dot_dimension_numbers<[1], [0], [0], [1], [0, 0, 1, 1], [], []>} : vector<16x32xf32>, vector<32x64xf32>, vector<16x64xf32> -> vector<16x64xf32>
    %25 = arith.addf %15, %24 : vector<16x64xf32>
    %c0_19 = arith.constant 0 : index
    %c0_20 = arith.constant 0 : index
    %26 = vector.load %arg4[%c0_19, %c0_20] : memref<1x64xf32, #tpu.memory_space<vmem>>, vector<1x64xf32>
    %27 = vector.broadcast %26 : vector<1x64xf32> to vector<16x64xf32>
    %28 = arith.addf %25, %27 : vector<16x64xf32>
    %c0_21 = arith.constant 0 : index
    %c0_22 = arith.constant 0 : index
    %c0_23 = arith.constant 0 : index
    %29 = vector.load %arg6[%c0_21, %c0_22, %c0_23] : memref<1x16x64xf32, #tpu.memory_space<vmem>>, vector<1x16x64xf32>
    %30 = vector.shape_cast %29 : vector<1x16x64xf32> to vector<16x64xf32>
    %31 = vector.shape_cast %28 : vector<16x64xf32> to vector<1x16x64xf32>
    tpu.vector_store %arg6[%c0_21, %c0_22, %c0_23], %31 {strides = array<i32>} : memref<1x16x64xf32, #tpu.memory_space<vmem>>, vector<1x16x64xf32>,
    return
  }
  func.func @transform_0(%arg0: i32, %arg1: i32) -> (i32, i32) {
    %c0_i32 = arith.constant 0 : i32
    %c0_i32_0 = arith.constant 0 : i32
    %c0_i32_1 = arith.constant 0 : i32
    return %c0_i32, %c0_i32_0 : i32, i32
  }
  func.func @transform_1(%arg0: i32, %arg1: i32) -> (i32, i32, i32) {
    %c0_i32 = arith.constant 0 : i32
    %c0_i32_0 = arith.constant 0 : i32
    %c0_i32_1 = arith.constant 0 : i32
    %c0_i32_2 = arith.constant 0 : i32
    return %c0_i32, %c0_i32_0, %c0_i32_1 : i32, i32, i32
  }
  func.func @transform_2(%arg0: i32, %arg1: i32) -> (i32, i32) {
    %c0_i32 = arith.constant 0 : i32
    %c0_i32_0 = arith.constant 0 : i32
    %c0_i32_1 = arith.constant 0 : i32
    return %c0_i32, %c0_i32_0 : i32, i32
  }
  func.func @transform_3(%arg0: i32, %arg1: i32) -> (i32, i32, i32) {
    %c0_i32 = arith.constant 0 : i32
    %c0_i32_0 = arith.constant 0 : i32
    return %arg0, %c0_i32, %arg1 : i32, i32, i32
  }
  func.func @transform_4(%arg0: i32, %arg1: i32) -> (i32, i32, i32) {
    %c0_i32 = arith.constant 0 : i32
    %c0_i32_0 = arith.constant 0 : i32
    return %arg0, %c0_i32, %arg1 : i32, i32, i32
  }
}

</mosaic_0001>

<llo_original>
// kernel: tpu_custom_call.1
$region0: #{tpu_custom_call.1}
  #allocation0 [shape = 'u32[]', space=smem, size = 0x4, offset = 0x4, fixed_abs, tag = 'smem constant byte address 0x4 - core index']
  #allocation1 [shape = 'u32[144,128]{1,0:T(1,128)}', space=vmem, size = 0x12000, scoped, tag = 'internal scratch']
  %s0 = inlined_call_operand.hbm [shape: f32[16,16], index: 0, kind: input, shape index: {}]
  %s1 = inlined_call_operand.hbm [shape: f32[3,32,64], index: 1, kind: input, shape index: {}]
  %s2 = inlined_call_operand.vmem [shape: f32[1,64], index: 2, kind: input, shape index: {}]
  %s3 = inlined_call_operand.hbm [shape: f32[2,16,32], index: 3, kind: input, shape index: {}]
  %s4 = inlined_call_operand.hbm [shape: f32[2,16,64], index: 4, kind: output, shape index: {}]
  %s5 = sld [smem:[#allocation0]]
  $region61: #{tpu_custom_call.1} parent=0
    _
  %s7 = ssub.s32 1, %s5
  %s8 = scalar_select 0, %s7, %s5
  $region1: #{tpu_custom_call.1} parent=0
    #allocation2 [shape = 'u8[8192]{0}', space=vmem, size = 0x2000, scoped, tag = 'input window, operand 0, single buffered']
    #allocation3 [shape = 's32[2]{0}', space=sflag, size = 0x8, scoped, tag = 'scoped memory for tpu_custom_call.1']
    #allocation4 [shape = 's32[2]{0}', space=sflag, size = 0x8, scoped, tag = 'scoped memory for tpu_custom_call.1']
    #allocation5 [shape = 'u8[49152]{0}', space=vmem, size = 0xc000, scoped, tag = 'input window, operand 1, single buffered']
    #allocation6 [shape = 's32[1]{0}', space=sflag, size = 0x4, scoped, tag = 'scoped memory for tpu_custom_call.1']
    #allocation7 [shape = 'u8[16384]{0}', space=vmem, size = 0x4000, scoped, tag = 'input window, operand 3']
    #allocation8 [shape = 'u8[16384]{0}', space=vmem, size = 0x4000, scoped, tag = 'output window, operand 0']
    %9 = vsyncpa [#allocation3], 0
    %10 = vsyncpa [#allocation6], 0
    %11 = vsyncpa [#allocation4], 0
    %s12 = scalar_lea.sflag [#allocation4], 1
    %13 = vsyncpa %s12, 0
    loop: start=0, step=1, limit=4
    $region2: #{tpu_custom_call.1} parent=1 // loop_pre_header
      _
    $region3: #{tpu_custom_call.1} parent=1 // loop_header
      %s15 = sphi 0, %s19
      %p16 = scmp.ge.s32.totalorder %s15, 4
      %s22 = sphi 0, %s34
      %s23 = sphi 0, %s30
      %s24 = sphi 0, %s22
      %s25 = sphi 0, %s23
      %s26 = sphi 0, %s24
      %s27 = sphi 0, %s25
      %s35 = sphi 0, %s35
      %s37 = sphi 0, %s35
      %s38 = sphi 0, %s37
      %s52 = sphi 0, %s38
      %s56 = sphi 0, %s56
      %s58 = sphi 0, %s56
      %s59 = sphi 0, %s58
      %s73 = sphi 0, %s59
      %s77 = sphi 0, %s77
      %s79 = sphi 0, %s77
      %s80 = sphi 0, %s79
      %s94 = sphi 0, %s80
      %s102 = sphi 0, %s104
      %s105 = sphi 0, %s102
      %s106 = sphi 0, %s105
      %s122 = sphi 0, %s106
      %s130 = sphi 0, %s132
      %s133 = sphi 0, %s130
      %s134 = sphi 0, %s133
      %s150 = sphi 0, %s134
    $region4: #{tpu_custom_call.1} parent=1 // loop_header_branch
      %18 = sbr.rel (%p16) target = $region8
    $region5: #{tpu_custom_call.1} parent=1 // loop_body
      %s20 = ssub.s32 %s15, 1
      %s21 = ssub.s32 %s15, 2
      %s28 = sadd.s32 1, %s23
      %p29 = scmp.ge.s32.totalorder %s28, 1
      %s30 = scalar_select %p29, 0, %s28
      %s31 = sadd.s32 1, %s22
      %s32 = scalar_select %p29, %s31, %s22
      %p33 = scmp.ge.s32.totalorder %s32, 2
      %s34 = scalar_select %p33, 0, %s32
      %s36 = sadd.s32 %s35, 1
      %p39 = scmp.eq.s32.totalorder %s15, 1
      %p40 = scmp.ne.s32.totalorder %s35, %s37
      %p41 = scmp.eq.s32.totalorder %s15, 0
      %p42 = por %p40, %p41
      %p43 = scmp.ne.s32.totalorder %s35, %s37
      %p44 = scmp.eq.s32.totalorder %s20, 1
      %p45 = por %p43, %p44
      %p46 = scmp.ne.s32.totalorder %s37, %s38
      %p47 = scmp.eq.s32.totalorder %s20, 0
      %p48 = por %p46, %p47
      %p49 = scmp.ne.s32.totalorder %s37, %s38
      %p50 = scmp.eq.s32.totalorder %s21, 1
      %p51 = por %p49, %p50
      %p53 = scmp.ne.s32.totalorder %s38, %s52
      %p54 = scmp.eq.s32.totalorder %s21, 0
      %p55 = por %p53, %p54
      %s57 = sadd.s32 %s56, 1
      %p60 = scmp.eq.s32.totalorder %s15, 1
      %p61 = scmp.ne.s32.totalorder %s56, %s58
      %p62 = scmp.eq.s32.totalorder %s15, 0
      %p63 = por %p61, %p62
      %p64 = scmp.ne.s32.totalorder %s56, %s58
      %p65 = scmp.eq.s32.totalorder %s20, 1
      %p66 = por %p64, %p65
      %p67 = scmp.ne.s32.totalorder %s58, %s59
      %p68 = scmp.eq.s32.totalorder %s20, 0
      %p69 = por %p67, %p68
      %p70 = scmp.ne.s32.totalorder %s58, %s59
      %p71 = scmp.eq.s32.totalorder %s21, 1
      %p72 = por %p70, %p71
      %p74 = scmp.ne.s32.totalorder %s59, %s73
      %p75 = scmp.eq.s32.totalorder %s21, 0
      %p76 = por %p74, %p75
      %s78 = sadd.s32 %s77, 1
      %p81 = scmp.eq.s32.totalorder %s15, 1
      %p82 = scmp.ne.s32.totalorder %s77, %s79
      %p83 = scmp.eq.s32.totalorder %s15, 0
      %p84 = por %p82, %p83
      %p85 = scmp.ne.s32.totalorder %s77, %s79
      %p86 = scmp.eq.s32.totalorder %s20, 1
      %p87 = por %p85, %p86
      %p88 = scmp.ne.s32.totalorder %s79, %s80
      %p89 = scmp.eq.s32.totalorder %s20, 0
      %p90 = por %p88, %p89
      %p91 = scmp.ne.s32.totalorder %s79, %s80
      %p92 = scmp.eq.s32.totalorder %s21, 1
      %p93 = por %p91, %p92
      %p95 = scmp.ne.s32.totalorder %s80, %s94
      %p96 = scmp.eq.s32.totalorder %s21, 0
      %p97 = por %p95, %p96
      %s98 = ssub.s32 %s22, %s34
      %s99 = ssub.s32 %s23, %s30
      %s100 = sor.u32 %s98, %s99
      %p101 = scmp.eq.s32.totalorder %s100, 0
      %s103 = sadd.s32 %s102, 1
      %s104 = scalar_select %p101, %s102, %s103
      %p107 = pneg %p101
      %p108 = scmp.eq.s32.totalorder %s15, 1
      %p109 = por %p107, %p108
      %p110 = scmp.ne.s32.totalorder %s102, %s105
      %p111 = scmp.eq.s32.totalorder %s15, 0
      %p112 = por %p110, %p111
      %p113 = scmp.ne.s32.totalorder %s102, %s105
      %p114 = scmp.eq.s32.totalorder %s20, 1
      %p115 = por %p113, %p114
      %p116 = scmp.ne.s32.totalorder %s105, %s106
      %p117 = scmp.eq.s32.totalorder %s20, 0
      %p118 = por %p116, %p117
      %p119 = scmp.ne.s32.totalorder %s105, %s106
      %p120 = scmp.eq.s32.totalorder %s21, 1
      %p121 = por %p119, %p120
      %p123 = scmp.ne.s32.totalorder %s106, %s122
      %p124 = scmp.eq.s32.totalorder %s21, 0
      %p125 = por %p123, %p124
      %s126 = ssub.s32 %s22, %s34
      %s127 = ssub.s32 %s23, %s30
      %s128 = sor.u32 %s126, %s127
      %p129 = scmp.eq.s32.totalorder %s128, 0
      %s131 = sadd.s32 %s130, 1
      %s132 = scalar_select %p129, %s130, %s131
      %p135 = pneg %p129
      %p136 = scmp.eq.s32.totalorder %s15, 1
      %p137 = por %p135, %p136
      %p138 = scmp.ne.s32.totalorder %s130, %s133
      %p139 = scmp.eq.s32.totalorder %s15, 0
      %p140 = por %p138, %p139
      %p141 = scmp.ne.s32.totalorder %s130, %s133
      %p142 = scmp.eq.s32.totalorder %s20, 1
      %p143 = por %p141, %p142
      %p144 = scmp.ne.s32.totalorder %s133, %s134
      %p145 = scmp.eq.s32.totalorder %s20, 0
      %p146 = por %p144, %p145
      %p147 = scmp.ne.s32.totalorder %s133, %s134
      %p148 = scmp.eq.s32.totalorder %s21, 1
      %p149 = por %p147, %p148
      %p151 = scmp.ne.s32.totalorder %s134, %s150
      %p152 = scmp.eq.s32.totalorder %s21, 0
      %p153 = por %p151, %p152
      %p154 = scmp.le.s32.totalorder 1, %s15
      %p155 = scmp.lt.s32.totalorder %s15, 3
      %p156 = pnand %p154, %p155
      %p157 = pneg %p156
      // Predicated region
      $region9: #{tpu_custom_call.1} parent=5 // pred_check
        _
      $region10: #{tpu_custom_call.1} parent=5 // pred_check_branch
        %159 = sbr.rel (%p156) target = $region12
      $region11: #{tpu_custom_call.1} parent=5 // pred_region
        %s160 = ssub.s32 %s15, 1
        // Predicated region
        $region13: #{tpu_custom_call.1} parent=11 // pred_check
          %p161 = pneg %p48
        $region14: #{tpu_custom_call.1} parent=11 // pred_check_branch
          %163 = sbr.rel (%p161) target = $region16
        $region15: #{tpu_custom_call.1} parent=11 // pred_region
          %s165 = ssub.s32 256, 256
          %166 = vsyncadd [#allocation3], %s165
          %s167 = sshll.u32 [#allocation2], 4
          %s168 = int_to_ptr.vmem [resolvable:$true] %s167
          %173 = dma.hbm_to_vmem [thread:$0]  %s0, 256, %s168, [#allocation3], 128, 128, 8
        $region16: #{tpu_custom_call.1} parent=11 // pred_fallthru
          _
        // Predicated region
        $region17: #{tpu_custom_call.1} parent=11 // pred_check
          %p174 = pneg %p69
        $region18: #{tpu_custom_call.1} parent=11 // pred_check_branch
          %176 = sbr.rel (%p174) target = $region20
        $region19: #{tpu_custom_call.1} parent=11 // pred_region
          %s178 = ssub.s32 1536, 1536
          %179 = vsyncadd [#allocation6], %s178
          %s180 = sshll.u32 [#allocation5], 4
          %s181 = int_to_ptr.vmem [resolvable:$true] %s180
          %186 = dma.hbm_to_vmem [thread:$0]  %s1, 1536, %s181, [#allocation6], 128, 128, 8
        $region20: #{tpu_custom_call.1} parent=11 // pred_fallthru
          _
        // Predicated region
        $region21: #{tpu_custom_call.1} parent=11 // pred_check
          %p187 = pneg %p90
        $region22: #{tpu_custom_call.1} parent=11 // pred_check_branch
          %189 = sbr.rel (%p187) target = $region24
        $region23: #{tpu_custom_call.1} parent=11 // pred_region
          _
        $region24: #{tpu_custom_call.1} parent=11 // pred_fallthru
          _
      $region12: #{tpu_custom_call.1} parent=5 // pred_fallthru
        _
      %p190 = scmp.lt.s32.totalorder %s15, 2
      // Predicated region
      $region25: #{tpu_custom_call.1} parent=5 // pred_check
        %p191 = pneg %p190
      $region26: #{tpu_custom_call.1} parent=5 // pred_check_branch
        %193 = sbr.rel (%p191) target = $region28
      $region27: #{tpu_custom_call.1} parent=5 // pred_region
        // Predicated region
        $region29: #{tpu_custom_call.1} parent=27 // pred_check
          %p194 = pneg %p112
        $region30: #{tpu_custom_call.1} parent=27 // pred_check_branch
          %196 = sbr.rel (%p194) target = $region32
        $region31: #{tpu_custom_call.1} parent=27 // pred_region
          %s197 = sand.u32 %s15, 1
          %s198 = scalar_lea.sflag [#allocation3], %s197
          %s199 = sand.u32 %s102, 1
          %s200 = smul.addr %s199, 16
          %s201 = scalar_lea.vmem [#allocation7], %s200
          %s203 = ssub.s32 256, 256
          %204 = vsyncadd %s198, %s203
          %s205 = smul.addr %s22, 2
          %s206 = sadd.s32 %s23, %s205
          %s207 = smul.addr %s206, 128
          %s208 = scalar_lea.hbm %s3, %s207
          %s209 = sshll.u32 %s201, 4
          %s210 = int_to_ptr.vmem [resolvable:$true] %s209
          %215 = dma.hbm_to_vmem [thread:$0]  %s208, 256, %s210, %s198, 128, 128, 8
        $region32: #{tpu_custom_call.1} parent=27 // pred_fallthru
          _
      $region28: #{tpu_custom_call.1} parent=5 // pred_fallthru
        _
      %p216 = scmp.le.s32.totalorder 1, %s15
      %p217 = scmp.lt.s32.totalorder %s15, 3
      %p218 = pnand %p216, %p217
      %p219 = pneg %p218
      // Predicated region
      $region33: #{tpu_custom_call.1} parent=5 // pred_check
        _
      $region34: #{tpu_custom_call.1} parent=5 // pred_check_branch
        %221 = sbr.rel (%p218) target = $region36
      $region35: #{tpu_custom_call.1} parent=5 // pred_region
        %s222 = ssub.s32 %s15, 1
        // Predicated region
        $region37: #{tpu_custom_call.1} parent=35 // pred_check
          %p223 = pneg %p48
        $region38: #{tpu_custom_call.1} parent=35 // pred_check_branch
          %225 = sbr.rel (%p223) target = $region40
        $region39: #{tpu_custom_call.1} parent=35 // pred_region
          %226 = dma.done [#allocation3], 256
        $region40: #{tpu_custom_call.1} parent=35 // pred_fallthru
          _
        // Predicated region
        $region41: #{tpu_custom_call.1} parent=35 // pred_check
          %p227 = pneg %p69
        $region42: #{tpu_custom_call.1} parent=35 // pred_check_branch
          %229 = sbr.rel (%p227) target = $region44
        $region43: #{tpu_custom_call.1} parent=35 // pred_region
          %230 = dma.done [#allocation6], 1536
        $region44: #{tpu_custom_call.1} parent=35 // pred_fallthru
          _
        %s231 = sand.u32 %s20, 1
        %s232 = scalar_lea.sflag [#allocation3], %s231
        %s233 = sand.u32 %s105, 1
        %s234 = smul.addr %s233, 16
        %s235 = scalar_lea.vmem [#allocation7], %s234
        // Predicated region
        $region45: #{tpu_custom_call.1} parent=35 // pred_check
          %p236 = pneg %p118
        $region46: #{tpu_custom_call.1} parent=35 // pred_check_branch
          %238 = sbr.rel (%p236) target = $region48
        $region47: #{tpu_custom_call.1} parent=35 // pred_region
          %239 = dma.done %s232, 256
        $region48: #{tpu_custom_call.1} parent=35 // pred_fallthru
          _
        %p240 = pneg %p48
        %p241 = pneg %p45
        %p242 = pneg %p69
        %p243 = pneg %p66
        %p244 = pneg %p90
        %p245 = pneg %p87
        %s246 = sand.u32 %s20, 1
        %s247 = scalar_lea.sflag [#allocation3], %s246
        %s248 = sand.u32 %s105, 1
        %s249 = smul.addr %s248, 16
        %s250 = scalar_lea.vmem [#allocation7], %s249
        %p251 = pneg %p118
        %p252 = pneg %p115
        %p253 = pneg %p146
        %p254 = pneg %p143
        %s255 = sand.u32 %s133, 1
        %s256 = scalar_lea.sflag [#allocation4], %s255
        %s257 = sand.u32 %s133, 1
        %s258 = smul.addr %s257, 16
        %s259 = scalar_lea.vmem [#allocation8], %s258
        %v260 = vld [vmem:[#allocation2] sm:$0xff]
        %v261 = vld [vmem:[#allocation2 + $0x8] sm:$0xff]
        %v262 = vld [vmem:[%s235] sm:$0xff]
        %v263 = vld [vmem:[%s235 + $0x8] sm:$0xff]
        %v264 = vld [vmem:[#allocation5] sm:$0xff]
        %v265 = vld [vmem:[#allocation5 + $0x8] sm:$0xff]
        %v266 = vld [vmem:[#allocation5 + $0x10] sm:$0xff]
        %v267 = vld [vmem:[#allocation5 + $0x18] sm:$0xff]
        %vm268 = vcmask 130048
        %v270 = vsel %vm268, %v260, 0
        %v273 = vsel %vm268, %v261, 0
        %275 = vmatprep.subr.mxu0 0.0
        %276 = vmatpush1.msra.mxu0 0.0
        %277 = vmatprep.subr.mxu0 0.0
        %278 = vmatpush1.msra.mxu0 0.0
        %279 = vmatprep.subr.mxu0 0.0
        %280 = vmatpush1.msra.mxu0 0.0
        %281 = vmatprep.subr.mxu0 0.0
        %282 = vmatpush1.msra.mxu0 0.0
        %283 = vmatprep.subr.mxu0 0.0
        %284 = vmatpush1.msra.mxu0 0.0
        %285 = vmatprep.subr.mxu0 0.0
        %286 = vmatpush1.msra.mxu0 0.0
        %287 = vmatprep.subr.mxu0 0.0
        %288 = vmatpush1.msra.mxu0 0.0
        %289 = vmatprep.subr.mxu0 0.0
        %290 = vmatpush1.msra.mxu0 0.0
        %291 = vmatprep.subr.mxu0 0.0
        %292 = vmatpush1.msra.mxu0 0.0
        %293 = vmatprep.subr.mxu0 0.0
        %294 = vmatpush1.msra.mxu0 0.0
        %295 = vmatprep.subr.mxu0 0.0
        %296 = vmatpush1.msra.mxu0 0.0
        %297 = vmatprep.subr.mxu0 0.0
        %298 = vmatpush1.msra.mxu0 0.0
        %299 = vmatprep.subr.mxu0 0.0
        %300 = vmatpush1.msra.mxu0 0.0
        %301 = vmatprep.subr.mxu0 0.0
        %302 = vmatpush1.msra.mxu0 0.0
        %303 = vmatprep.subr.mxu0 0.0
        %304 = vmatpush1.msra.mxu0 %v263
        %305 = vmatprep.subr.mxu0 0.0
        %306 = vmatpush1.msra.mxu0 %v262
        %307 = vmatprep.subr.mxu0 0.0
        %308 = vmatpush2.msra.mxu0 0.0
        %309 = vmatprep.subr.mxu0 0.0
        %310 = vmatpush2.msra.mxu0 0.0
        %311 = vmatprep.subr.mxu0 0.0
        %312 = vmatpush2.msra.mxu0 0.0
        %313 = vmatprep.subr.mxu0 0.0
        %314 = vmatpush2.msra.mxu0 0.0
        %315 = vmatprep.subr.mxu0 0.0
        %316 = vmatpush2.msra.mxu0 0.0
        %317 = vmatprep.subr.mxu0 0.0
        %318 = vmatpush2.msra.mxu0 0.0
        %319 = vmatprep.subr.mxu0 0.0
        %320 = vmatpush2.msra.mxu0 0.0
        %321 = vmatprep.subr.mxu0 0.0
        %322 = vmatpush2.msra.mxu0 0.0
        %323 = vmatprep.subr.mxu0 0.0
        %324 = vmatpush2.msra.mxu0 0.0
        %325 = vmatprep.subr.mxu0 0.0
        %326 = vmatpush2.msra.mxu0 0.0
        %327 = vmatprep.subr.mxu0 0.0
        %328 = vmatpush2.msra.mxu0 0.0
        %329 = vmatprep.subr.mxu0 0.0
        %330 = vmatpush2.msra.mxu0 0.0
        %331 = vmatprep.subr.mxu0 0.0
        %332 = vmatpush2.msra.mxu0 0.0
        %333 = vmatprep.subr.mxu0 0.0
        %334 = vmatpush2.msra.mxu0 0.0
        %335 = vmatprep.subr.mxu0 0.0
        %336 = vmatpush2.msra.mxu0 0.0
        %337 = vmatprep.subr.mxu0 0.0
        %338 = vmatpush2.msra.mxu0 0.0
        %339 = vmatprep.mubr.f32.mxu0 0.0
        %340 = vmatmul.mubr.f32.gmra.mxu0 %v270
        %v341 = vpop.f32.mrf.mxu0
        %v342 = vadd.f32 0.0, %v341
        %v343 = vpop.f32.mrf.mxu0
        %344 = vmatprep.mubr.f32.mxu0 0.0
        %345 = vmatmul.mubr.f32.gmra.mxu0 %v273
        %v346 = vpop.f32.mrf.mxu0
        %v347 = vadd.f32 0.0, %v346
        %v348 = vpop.f32.mrf.mxu0
        %349 = vdwg.mxu0
        %v350 = vmul.f32 %v262, 0.05
        %v351 = vmul.f32 %v263, 0.05
        %v352 = vmul.f32 %v342, 0.95
        %v353 = vmul.f32 %v347, 0.95
        %v354 = vadd.f32 %v350, %v352
        %v355 = vadd.f32 %v351, %v353
        %s356 = scalar_lea.vmem [#allocation5], 32
        %v357 = vld [vmem:[%s356] sm:$0xff]
        %v358 = vld [vmem:[%s356 + $0x8] sm:$0xff]
        %v359 = vld [vmem:[%s356 + $0x10] sm:$0xff]
        %v360 = vld [vmem:[%s356 + $0x18] sm:$0xff]
        %vm361 = vcmask 261120
        %v363 = vsel %vm361, %v354, 0
        %v366 = vsel %vm361, %v355, 0
        %368 = vmatprep.subr.mxu0 0.0
        %369 = vmatpush1.msra.mxu0 0.0
        %370 = vmatprep.subr.mxu0 0.0
        %371 = vmatpush1.msra.mxu0 0.0
        %372 = vmatprep.subr.mxu0 0.0
        %373 = vmatpush1.msra.mxu0 0.0
        %374 = vmatprep.subr.mxu0 0.0
        %375 = vmatpush1.msra.mxu0 0.0
        %376 = vmatprep.subr.mxu0 0.0
        %377 = vmatpush1.msra.mxu0 0.0
        %378 = vmatprep.subr.mxu0 0.0
        %379 = vmatpush1.msra.mxu0 0.0
        %380 = vmatprep.subr.mxu0 0.0
        %381 = vmatpush1.msra.mxu0 0.0
        %382 = vmatprep.subr.mxu0 0.0
        %383 = vmatpush1.msra.mxu0 0.0
        %384 = vmatprep.subr.mxu0 0.0
        %385 = vmatpush1.msra.mxu0 0.0
        %386 = vmatprep.subr.mxu0 0.0
        %387 = vmatpush1.msra.mxu0 0.0
        %388 = vmatprep.subr.mxu0 0.0
        %389 = vmatpush1.msra.mxu0 0.0
        %390 = vmatprep.subr.mxu0 0.0
        %391 = vmatpush1.msra.mxu0 0.0
        %392 = vmatprep.subr.mxu0 0.0
        %393 = vmatpush1.msra.mxu0 %v360
        %394 = vmatprep.subr.mxu0 0.0
        %395 = vmatpush1.msra.mxu0 %v359
        %396 = vmatprep.subr.mxu0 0.0
        %397 = vmatpush1.msra.mxu0 %v358
        %398 = vmatprep.subr.mxu0 0.0
        %399 = vmatpush1.msra.mxu0 %v357
        %400 = vmatprep.subr.mxu0 0.0
        %401 = vmatpush2.msra.mxu0 0.0
        %402 = vmatprep.subr.mxu0 0.0
        %403 = vmatpush2.msra.mxu0 0.0
        %404 = vmatprep.subr.mxu0 0.0
        %405 = vmatpush2.msra.mxu0 0.0
        %406 = vmatprep.subr.mxu0 0.0
        %407 = vmatpush2.msra.mxu0 0.0
        %408 = vmatprep.subr.mxu0 0.0
        %409 = vmatpush2.msra.mxu0 0.0
        %410 = vmatprep.subr.mxu0 0.0
        %411 = vmatpush2.msra.mxu0 0.0
        %412 = vmatprep.subr.mxu0 0.0
        %413 = vmatpush2.msra.mxu0 0.0
        %414 = vmatprep.subr.mxu0 0.0
        %415 = vmatpush2.msra.mxu0 0.0
        %416 = vmatprep.subr.mxu0 0.0
        %417 = vmatpush2.msra.mxu0 0.0
        %418 = vmatprep.subr.mxu0 0.0
        %419 = vmatpush2.msra.mxu0 0.0
        %420 = vmatprep.subr.mxu0 0.0
        %421 = vmatpush2.msra.mxu0 0.0
        %422 = vmatprep.subr.mxu0 0.0
        %423 = vmatpush2.msra.mxu0 0.0
        %424 = vmatprep.subr.mxu0 0.0
        %425 = vmatpush2.msra.mxu0 0.0
        %426 = vmatprep.subr.mxu0 0.0
        %427 = vmatpush2.msra.mxu0 0.0
        %428 = vmatprep.subr.mxu0 0.0
        %429 = vmatpush2.msra.mxu0 0.0
        %430 = vmatprep.subr.mxu0 0.0
        %431 = vmatpush2.msra.mxu0 0.0
        %432 = vmatprep.mubr.f32.mxu0 0.0
        %433 = vmatmul.mubr.f32.gmra.mxu0 %v363
        %v434 = vpop.f32.mrf.mxu0
        %v435 = vadd.f32 0.0, %v434
        %v436 = vpop.f32.mrf.mxu0
        %437 = vmatprep.mubr.f32.mxu0 0.0
        %438 = vmatmul.mubr.f32.gmra.mxu0 %v366
        %v439 = vpop.f32.mrf.mxu0
        %v440 = vadd.f32 0.0, %v439
        %v441 = vpop.f32.mrf.mxu0
        %442 = vdwg.mxu0
        %v444 = vsel %vm361, %v262, 0
        %v447 = vsel %vm361, %v263, 0
        %449 = vmatprep.subr.mxu0 0.0
        %450 = vmatpush1.msra.mxu0 0.0
        %451 = vmatprep.subr.mxu0 0.0
        %452 = vmatpush1.msra.mxu0 0.0
        %453 = vmatprep.subr.mxu0 0.0
        %454 = vmatpush1.msra.mxu0 0.0
        %455 = vmatprep.subr.mxu0 0.0
        %456 = vmatpush1.msra.mxu0 0.0
        %457 = vmatprep.subr.mxu0 0.0
        %458 = vmatpush1.msra.mxu0 0.0
        %459 = vmatprep.subr.mxu0 0.0
        %460 = vmatpush1.msra.mxu0 0.0
        %461 = vmatprep.subr.mxu0 0.0
        %462 = vmatpush1.msra.mxu0 0.0
        %463 = vmatprep.subr.mxu0 0.0
        %464 = vmatpush1.msra.mxu0 0.0
        %465 = vmatprep.subr.mxu0 0.0
        %466 = vmatpush1.msra.mxu0 0.0
        %467 = vmatprep.subr.mxu0 0.0
        %468 = vmatpush1.msra.mxu0 0.0
        %469 = vmatprep.subr.mxu0 0.0
        %470 = vmatpush1.msra.mxu0 0.0
        %471 = vmatprep.subr.mxu0 0.0
        %472 = vmatpush1.msra.mxu0 0.0
        %473 = vmatprep.subr.mxu0 0.0
        %474 = vmatpush1.msra.mxu0 %v267
        %475 = vmatprep.subr.mxu0 0.0
        %476 = vmatpush1.msra.mxu0 %v266
        %477 = vmatprep.subr.mxu0 0.0
        %478 = vmatpush1.msra.mxu0 %v265
        %479 = vmatprep.subr.mxu0 0.0
        %480 = vmatpush1.msra.mxu0 %v264
        %481 = vmatprep.subr.mxu0 0.0
        %482 = vmatpush2.msra.mxu0 0.0
        %483 = vmatprep.subr.mxu0 0.0
        %484 = vmatpush2.msra.mxu0 0.0
        %485 = vmatprep.subr.mxu0 0.0
        %486 = vmatpush2.msra.mxu0 0.0
        %487 = vmatprep.subr.mxu0 0.0
        %488 = vmatpush2.msra.mxu0 0.0
        %489 = vmatprep.subr.mxu0 0.0
        %490 = vmatpush2.msra.mxu0 0.0
        %491 = vmatprep.subr.mxu0 0.0
        %492 = vmatpush2.msra.mxu0 0.0
        %493 = vmatprep.subr.mxu0 0.0
        %494 = vmatpush2.msra.mxu0 0.0
        %495 = vmatprep.subr.mxu0 0.0
        %496 = vmatpush2.msra.mxu0 0.0
        %497 = vmatprep.subr.mxu0 0.0
        %498 = vmatpush2.msra.mxu0 0.0
        %499 = vmatprep.subr.mxu0 0.0
        %500 = vmatpush2.msra.mxu0 0.0
        %501 = vmatprep.subr.mxu0 0.0
        %502 = vmatpush2.msra.mxu0 0.0
        %503 = vmatprep.subr.mxu0 0.0
        %504 = vmatpush2.msra.mxu0 0.0
        %505 = vmatprep.subr.mxu0 0.0
        %506 = vmatpush2.msra.mxu0 0.0
        %507 = vmatprep.subr.mxu0 0.0
        %508 = vmatpush2.msra.mxu0 0.0
        %509 = vmatprep.subr.mxu0 0.0
        %510 = vmatpush2.msra.mxu0 0.0
        %511 = vmatprep.subr.mxu0 0.0
        %512 = vmatpush2.msra.mxu0 0.0
        %513 = vmatprep.mubr.f32.mxu0 0.0
        %514 = vmatmul.mubr.f32.gmra.mxu0 %v444
        %v515 = vpop.f32.mrf.mxu0
        %v516 = vadd.f32 %v435, %v515
        %v517 = vpop.f32.mrf.mxu0
        %518 = vmatprep.mubr.f32.mxu0 0.0
        %519 = vmatmul.mubr.f32.gmra.mxu0 %v447
        %v520 = vpop.f32.mrf.mxu0
        %v521 = vadd.f32 %v440, %v520
        %v522 = vpop.f32.mrf.mxu0
        %523 = vdwg.mxu0
        %524 = vmatprep.subr.mxu0 0.0
        %525 = vmatpush1.msra.mxu0 0.0
        %526 = vmatprep.subr.mxu0 0.0
        %527 = vmatpush1.msra.mxu0 0.0
        %528 = vmatprep.subr.mxu0 0.0
        %529 = vmatpush1.msra.mxu0 0.0
        %530 = vmatprep.subr.mxu0 0.0
        %531 = vmatpush1.msra.mxu0 0.0
        %532 = vmatprep.subr.mxu0 0.0
        %533 = vmatpush1.msra.mxu0 0.0
        %534 = vmatprep.subr.mxu0 0.0
        %535 = vmatpush1.msra.mxu0 0.0
        %536 = vmatprep.subr.mxu0 0.0
        %537 = vmatpush1.msra.mxu0 0.0
        %538 = vmatprep.subr.mxu0 0.0
        %539 = vmatpush1.msra.mxu0 0.0
        %540 = vmatprep.subr.mxu0 0.0
        %541 = vmatpush1.msra.mxu0 0.0
        %542 = vmatprep.subr.mxu0 0.0
        %543 = vmatpush1.msra.mxu0 0.0
        %544 = vmatprep.subr.mxu0 0.0
        %545 = vmatpush1.msra.mxu0 0.0
        %546 = vmatprep.subr.mxu0 0.0
        %547 = vmatpush1.msra.mxu0 0.0
        %548 = vmatprep.subr.mxu0 0.0
        %549 = vmatpush1.msra.mxu0 0.0
        %550 = vmatprep.subr.mxu0 0.0
        %551 = vmatpush1.msra.mxu0 0.0
        %552 = vmatprep.subr.mxu0 0.0
        %553 = vmatpush1.msra.mxu0 %v355
        %554 = vmatprep.subr.mxu0 0.0
        %555 = vmatpush1.msra.mxu0 %v354
        %556 = vmatprep.subr.mxu0 0.0
        %557 = vmatpush2.msra.mxu0 0.0
        %558 = vmatprep.subr.mxu0 0.0
        %559 = vmatpush2.msra.mxu0 0.0
        %560 = vmatprep.subr.mxu0 0.0
        %561 = vmatpush2.msra.mxu0 0.0
        %562 = vmatprep.subr.mxu0 0.0
        %563 = vmatpush2.msra.mxu0 0.0
        %564 = vmatprep.subr.mxu0 0.0
        %565 = vmatpush2.msra.mxu0 0.0
        %566 = vmatprep.subr.mxu0 0.0
        %567 = vmatpush2.msra.mxu0 0.0
        %568 = vmatprep.subr.mxu0 0.0
        %569 = vmatpush2.msra.mxu0 0.0
        %570 = vmatprep.subr.mxu0 0.0
        %571 = vmatpush2.msra.mxu0 0.0
        %572 = vmatprep.subr.mxu0 0.0
        %573 = vmatpush2.msra.mxu0 0.0
        %574 = vmatprep.subr.mxu0 0.0
        %575 = vmatpush2.msra.mxu0 0.0
        %576 = vmatprep.subr.mxu0 0.0
        %577 = vmatpush2.msra.mxu0 0.0
        %578 = vmatprep.subr.mxu0 0.0
        %579 = vmatpush2.msra.mxu0 0.0
        %580 = vmatprep.subr.mxu0 0.0
        %581 = vmatpush2.msra.mxu0 0.0
        %582 = vmatprep.subr.mxu0 0.0
        %583 = vmatpush2.msra.mxu0 0.0
        %584 = vmatprep.subr.mxu0 0.0
        %585 = vmatpush2.msra.mxu0 0.0
        %586 = vmatprep.subr.mxu0 0.0
        %587 = vmatpush2.msra.mxu0 0.0
        %588 = vmatprep.mubr.f32.mxu0 0.0
        %589 = vmatmul.mubr.f32.gmra.mxu0 %v270
        %v590 = vpop.f32.mrf.mxu0
        %v591 = vadd.f32 0.0, %v590
        %v592 = vpop.f32.mrf.mxu0
        %593 = vmatprep.mubr.f32.mxu0 0.0
        %594 = vmatmul.mubr.f32.gmra.mxu0 %v273
        %v595 = vpop.f32.mrf.mxu0
        %v596 = vadd.f32 0.0, %v595
        %v597 = vpop.f32.mrf.mxu0
        %598 = vdwg.mxu0
        %v599 = vmul.f32 %v591, 0.95
        %v600 = vmul.f32 %v596, 0.95
        %v601 = vadd.f32 %v350, %v599
        %v602 = vadd.f32 %v351, %v600
        %s603 = scalar_lea.vmem [#allocation5], 64
        %v604 = vld [vmem:[%s603] sm:$0xff]
        %v605 = vld [vmem:[%s603 + $0x8] sm:$0xff]
        %v606 = vld [vmem:[%s603 + $0x10] sm:$0xff]
        %v607 = vld [vmem:[%s603 + $0x18] sm:$0xff]
        %v609 = vsel %vm361, %v601, 0
        %v612 = vsel %vm361, %v602, 0
        %614 = vmatprep.subr.mxu0 0.0
        %615 = vmatpush1.msra.mxu0 0.0
        %616 = vmatprep.subr.mxu0 0.0
        %617 = vmatpush1.msra.mxu0 0.0
        %618 = vmatprep.subr.mxu0 0.0
        %619 = vmatpush1.msra.mxu0 0.0
        %620 = vmatprep.subr.mxu0 0.0
        %621 = vmatpush1.msra.mxu0 0.0
        %622 = vmatprep.subr.mxu0 0.0
        %623 = vmatpush1.msra.mxu0 0.0
        %624 = vmatprep.subr.mxu0 0.0
        %625 = vmatpush1.msra.mxu0 0.0
        %626 = vmatprep.subr.mxu0 0.0
        %627 = vmatpush1.msra.mxu0 0.0
        %628 = vmatprep.subr.mxu0 0.0
        %629 = vmatpush1.msra.mxu0 0.0
        %630 = vmatprep.subr.mxu0 0.0
        %631 = vmatpush1.msra.mxu0 0.0
        %632 = vmatprep.subr.mxu0 0.0
        %633 = vmatpush1.msra.mxu0 0.0
        %634 = vmatprep.subr.mxu0 0.0
        %635 = vmatpush1.msra.mxu0 0.0
        %636 = vmatprep.subr.mxu0 0.0
        %637 = vmatpush1.msra.mxu0 0.0
        %638 = vmatprep.subr.mxu0 0.0
        %639 = vmatpush1.msra.mxu0 %v607
        %640 = vmatprep.subr.mxu0 0.0
        %641 = vmatpush1.msra.mxu0 %v606
        %642 = vmatprep.subr.mxu0 0.0
        %643 = vmatpush1.msra.mxu0 %v605
        %644 = vmatprep.subr.mxu0 0.0
        %645 = vmatpush1.msra.mxu0 %v604
        %646 = vmatprep.subr.mxu0 0.0
        %647 = vmatpush2.msra.mxu0 0.0
        %648 = vmatprep.subr.mxu0 0.0
        %649 = vmatpush2.msra.mxu0 0.0
        %650 = vmatprep.subr.mxu0 0.0
        %651 = vmatpush2.msra.mxu0 0.0
        %652 = vmatprep.subr.mxu0 0.0
        %653 = vmatpush2.msra.mxu0 0.0
        %654 = vmatprep.subr.mxu0 0.0
        %655 = vmatpush2.msra.mxu0 0.0
        %656 = vmatprep.subr.mxu0 0.0
        %657 = vmatpush2.msra.mxu0 0.0
        %658 = vmatprep.subr.mxu0 0.0
        %659 = vmatpush2.msra.mxu0 0.0
        %660 = vmatprep.subr.mxu0 0.0
        %661 = vmatpush2.msra.mxu0 0.0
        %662 = vmatprep.subr.mxu0 0.0
        %663 = vmatpush2.msra.mxu0 0.0
        %664 = vmatprep.subr.mxu0 0.0
        %665 = vmatpush2.msra.mxu0 0.0
        %666 = vmatprep.subr.mxu0 0.0
        %667 = vmatpush2.msra.mxu0 0.0
        %668 = vmatprep.subr.mxu0 0.0
        %669 = vmatpush2.msra.mxu0 0.0
        %670 = vmatprep.subr.mxu0 0.0
        %671 = vmatpush2.msra.mxu0 0.0
        %672 = vmatprep.subr.mxu0 0.0
        %673 = vmatpush2.msra.mxu0 0.0
        %674 = vmatprep.subr.mxu0 0.0
        %675 = vmatpush2.msra.mxu0 0.0
        %676 = vmatprep.subr.mxu0 0.0
        %677 = vmatpush2.msra.mxu0 0.0
        %678 = vmatprep.mubr.f32.mxu0 0.0
        %679 = vmatmul.mubr.f32.gmra.mxu0 %v609
        %v680 = vpop.f32.mrf.mxu0
        %v681 = vadd.f32 0.0, %v680
        %v682 = vpop.f32.mrf.mxu0
        %683 = vmatprep.mubr.f32.mxu0 0.0
        %684 = vmatmul.mubr.f32.gmra.mxu0 %v612
        %v685 = vpop.f32.mrf.mxu0
        %v686 = vadd.f32 0.0, %v685
        %v687 = vpop.f32.mrf.mxu0
        %688 = vdwg.mxu0
        %v689 = vadd.f32 %v516, %v681
        %v690 = vadd.f32 %v521, %v686
        %v691 = vld [vmem:[%s2] sm:$0x1]
        %v693 = vlaneseq
        %v694 = vshrl.u32 %v693, 7
        %v695 = vsub.s32 0, %v694
        %v696 = vrot.slane %v691, %v695
        %v698 = vadd.f32 %v689, %v696
        %v699 = vadd.f32 %v690, %v696
        %vm700 = vcmask 523264
        %701 = vst.msk [vmem:[%s259] sm:$0xff] %vm700, %v698
        %702 = vst.msk [vmem:[%s259 + $0x8] sm:$0xff] %vm700, %v699
        %s703 = sand.u32 %s133, 1
        %s704 = scalar_lea.sflag [#allocation4], %s703
        %s705 = sand.u32 %s133, 1
        %s706 = smul.addr %s705, 16
        %s707 = scalar_lea.vmem [#allocation8], %s706
        // Predicated region
        $region49: #{tpu_custom_call.1} parent=35 // pred_check
          %p708 = pneg %p143
        $region50: #{tpu_custom_call.1} parent=35 // pred_check_branch
          %710 = sbr.rel (%p708) target = $region52
        $region51: #{tpu_custom_call.1} parent=35 // pred_region
          %s712 = ssub.s32 256, 256
          %713 = vsyncadd %s704, %s712
          %s714 = smul.addr %s24, 2
          %s715 = sadd.s32 %s25, %s714
          %s716 = smul.addr %s715, 128
          %s717 = scalar_lea.hbm %s4, %s716
          %s718 = sshll.u32 %s707, 4
          %s719 = int_to_ptr.vmem [resolvable:$true] %s718
          %724 = dma.vmem_to_hbm [thread:$0]  %s719, 256, %s717, %s704, 128, 128, 8
        $region52: #{tpu_custom_call.1} parent=35 // pred_fallthru
          _
      $region36: #{tpu_custom_call.1} parent=5 // pred_fallthru
        _
      %p725 = scmp.le.s32.totalorder 2, %s15
      // Predicated region
      $region53: #{tpu_custom_call.1} parent=5 // pred_check
        %p726 = pneg %p725
      $region54: #{tpu_custom_call.1} parent=5 // pred_check_branch
        %728 = sbr.rel (%p726) target = $region56
      $region55: #{tpu_custom_call.1} parent=5 // pred_region
        %s729 = ssub.s32 %s15, 2
        // Predicated region
        $region57: #{tpu_custom_call.1} parent=55 // pred_check
          %p730 = pneg %p149
        $region58: #{tpu_custom_call.1} parent=55 // pred_check_branch
          %732 = sbr.rel (%p730) target = $region60
        $region59: #{tpu_custom_call.1} parent=55 // pred_region
          %s733 = sand.u32 %s134, 1
          %s734 = scalar_lea.sflag [#allocation4], %s733
          %s735 = sand.u32 %s134, 1
          %s736 = smul.addr %s735, 16
          %s737 = scalar_lea.vmem [#allocation8], %s736
          %738 = dma.done %s734, 256
        $region60: #{tpu_custom_call.1} parent=55 // pred_fallthru
          _
      $region56: #{tpu_custom_call.1} parent=5 // pred_fallthru
        _
    $region6: #{tpu_custom_call.1} parent=1 // loop_footer
      %s19 = sadd.s32 1, %s15
    $region7: #{tpu_custom_call.1} parent=1 // loop_footer_branch
      %14 = sbr.rel target = $region3
    $region8: #{tpu_custom_call.1} parent=1 // loop_exit
      _
    %739 = vsyncpa [#allocation3], 1
    %s740 = scalar_lea.sflag [#allocation3], 1
    %741 = vsyncpa %s740, 1
    %742 = vsyncpa [#allocation6], 1
    %743 = vsyncpa [#allocation4], 1
    %s744 = scalar_lea.sflag [#allocation4], 1
    %745 = vsyncpa %s744, 1

</llo_original>
